<compile_context>
chip_gen: v7x
topology: tpu7x:2x2x1
jax: 0.10.0
libtpu: 0.0.40
codegen_flags: <defaults>
</compile_context>

<pallas_src>
import jax
import jax.numpy as jnp
from jax.experimental import pallas as pl
from jax.experimental.pallas import tpu as pltpu


def _zero_layer_kernel(tok_ref, w_e_ref, w_u_ref, b_ref, out_ref, emb_ref):
    """Grid = (token tiles, vocab tiles).

    tok_ref : VMEM int32[tm, 1]   token ids for this token tile
    w_e_ref : VMEM bf16 [V, D]    full embedding table (constant block index
                                  -> DMA'd into VMEM once, not per tile)
    w_u_ref : VMEM bf16 [D, tv]   unembedding tile for this vocab tile
    b_ref   : VMEM f32  [1, tv]   bias tile
    out_ref : VMEM f32  [tm, tv]  logits tile
    emb_ref : VMEM bf16 [tm, D]   scratch: embeddings of this token tile
                                  (persists across the vocab grid axis)
    """
    j = pl.program_id(1)

    # Embedding lookup once per token tile (vocab-tile index 0), reused for
    # every vocab tile j of the same token tile.
    @pl.when(j == 0)
    def _():
        tm = tok_ref.shape[0]
        v = w_e_ref.shape[0]
        tok = tok_ref[...]                                         # (tm, 1) i32
        col_ids = jax.lax.broadcasted_iota(jnp.int32, (tm, v), 1)   # (tm, V)
        onehot = (col_ids == tok).astype(w_e_ref.dtype)             # exact one-hot
        emb = jnp.dot(onehot, w_e_ref[...],
                      preferred_element_type=jnp.float32)           # (tm, D)
        # One-hot selects exact bf16 rows, so the f32 -> bf16 cast is exact.
        emb_ref[...] = emb.astype(emb_ref.dtype)

    # Unembedding projection for this vocab tile: (tm, D) @ (D, tv) + (1, tv).
    logits = jnp.dot(emb_ref[...], w_u_ref[...],
                     preferred_element_type=jnp.float32)
    out_ref[...] = logits + b_ref[...]


def _round_up(x, m):
    return ((x + m - 1) // m) * m


def zero_layer_transformer(tokens, w_embed, w_unembed, b_unembed, *, tm=128, tv=512):
    """tokens: int[B, T]; w_embed: f32[V, D]; w_unembed: f32[D, V] (Linear
    weight pre-transposed); b_unembed: f32[V].  Returns logits f32[B, T, V]."""
    B, T = tokens.shape
    V, D = w_embed.shape
    assert w_unembed.shape == (D, V)
    assert b_unembed.shape == (V,)
    M = B * T

    # Clamp the token tile to the (sublane-rounded) token count so small
    # inputs do not compute 8x padded rows; keep it a multiple of 8.
    tm = max(8, min(tm, _round_up(M, 8)))
    Mp = _round_up(M, tm)

    # Vocab padded to a lane-dense multiple of 128 and tiled by tv.
    tv = min(tv, _round_up(V, 128))
    Vp = _round_up(V, tv)

    tokens_flat = jnp.zeros((Mp,), jnp.int32).at[:M].set(
        tokens.reshape(M).astype(jnp.int32))
    tokens_col = tokens_flat.reshape(Mp, 1)

    w_e = w_embed.astype(jnp.bfloat16)                                   # (V, D)
    w_u = jnp.zeros((D, Vp), jnp.bfloat16).at[:, :V].set(
        w_unembed.astype(jnp.bfloat16))                                  # (D, Vp)
    bias = jnp.zeros((1, Vp), jnp.float32).at[0, :V].set(
        b_unembed.astype(jnp.float32))                                   # (1, Vp)

    grid = (Mp // tm, Vp // tv)

    # Rough double-buffered VMEM footprint (+headroom), clamped to 64 MiB so
    # the request is valid on every generation (v7x has 64 MiB physical VMEM).
    est = (2 * V * D * 2            # W_E bf16 (double buffered by the pipeline)
           + 2 * D * tv * 2         # W_U tile
           + 2 * 8 * tv * 4         # bias tile (sublane padded)
           + 2 * tm * tv * 4        # output tile
           + 2 * tm * 128 * 4       # token-id tile (lane padded)
           + tm * D * 2)            # embedding scratch
    vmem_limit = int(min(64 * 1024 * 1024, max(4 * 1024 * 1024, 4 * est)))

    logits = pl.pallas_call(
        _zero_layer_kernel,
        out_shape=jax.ShapeDtypeStruct((Mp, Vp), jnp.float32),
        grid_spec=pltpu.PrefetchScalarGridSpec(
            num_scalar_prefetch=0,
            grid=grid,
            in_specs=[
                pl.BlockSpec((tm, 1), lambda i, j: (i, 0)),   # token ids
                pl.BlockSpec((V, D), lambda i, j: (0, 0)),    # full embed table
                pl.BlockSpec((D, tv), lambda i, j: (0, j)),   # unembed tile
                pl.BlockSpec((1, tv), lambda i, j: (0, j)),   # bias tile
            ],
            out_specs=pl.BlockSpec((tm, tv), lambda i, j: (i, j)),
            scratch_shapes=[pltpu.VMEM((tm, D), jnp.bfloat16)],
        ),
        compiler_params=pltpu.CompilerParams(
            dimension_semantics=("parallel", "arbitrary"),
            vmem_limit_bytes=vmem_limit,
        ),
    )(tokens_col, w_e, w_u, bias)

    return logits[:M, :V].reshape(B, T, V)


if __name__ == "__main__":
    # Small deterministic setup consistent with the module:
    #   embedder   ~ nn.Embedding(n_vocab=64, d_model=32)
    #   unembedder ~ nn.Linear(32, 64)  (weight stored pre-transposed as [D, V])
    B, T, V, D = 2, 8, 64, 32

    key = jax.random.PRNGKey(0)
    k_tok, k_we, k_wu, k_b = jax.random.split(key, 4)

    tokens = jax.random.randint(k_tok, (B, T), 0, V, dtype=jnp.int32)
    w_embed = jax.random.normal(k_we, (V, D), dtype=jnp.float32) * 0.02
    w_unembed = jax.random.normal(k_wu, (D, V), dtype=jnp.float32) * 0.02
    b_unembed = jax.random.normal(k_b, (V,), dtype=jnp.float32) * 0.01

    logits = zero_layer_transformer(tokens, w_embed, w_unembed, b_unembed)
    logits = jax.block_until_ready(logits)

    # Pure-JAX reference using the same bf16-rounded weights (f32 accumulate),
    # matching the kernel's TPU-idiomatic precision.
    w_e_bf = w_embed.astype(jnp.bfloat16).astype(jnp.float32)
    w_u_bf = w_unembed.astype(jnp.bfloat16).astype(jnp.float32)
    ref = jnp.take(w_e_bf, tokens.reshape(-1), axis=0) @ w_u_bf + b_unembed
    ref = ref.reshape(B, T, V)

    assert logits.shape == (B, T, V), logits.shape
    assert jnp.allclose(logits, ref, atol=2e-3, rtol=2e-3), "mismatch vs reference"

    print("KERNEL_OK")
</pallas_src>

<mosaic_0001>
module attributes {stable_mosaic.version = 11 : i64} {
  func.func @_zero_layer_kernel(%arg0: i32, %arg1: i32, %arg2: memref<16x1xi32, #tpu.memory_space<vmem>>, %arg3: memref<64x32xbf16, #tpu.memory_space<vmem>>, %arg4: memref<32x128xbf16, #tpu.memory_space<vmem>>, %arg5: memref<1x128xf32, #tpu.memory_space<vmem>>, %arg6: memref<16x128xf32, #tpu.memory_space<vmem>>, %arg7: memref<16x32xbf16, #tpu.memory_space<vmem>>) attributes {dimension_semantics = [#tpu.dimension_semantics<parallel>, #tpu.dimension_semantics<arbitrary>], iteration_bounds = array<i64: 1, 1>, scalar_prefetch = 0 : i64, scratch_operands = 1 : i64, tpu.core_type = #tpu.core_type<tc>, window_params = [{transform_indices = @transform_0, window_bounds = array<i64: 16, 1>}, {pipeline_mode = #tpu.pipeline_mode<synchronous>, transform_indices = @transform_1, window_bounds = array<i64: 64, 32>}, {transform_indices = @transform_2, window_bounds = array<i64: 32, 128>}, {transform_indices = @transform_3, window_bounds = array<i64: 1, 128>}, {transform_indices = @transform_4, window_bounds = array<i64: 16, 128>}]} {
    %c0_i32 = arith.constant 0 : i32
    %0 = arith.cmpi eq, %arg1, %c0_i32 : i32
    %1 = arith.extui %0 : i1 to i32
    %c0_i32_0 = arith.constant 0 : i32
    %2 = arith.cmpi ne, %1, %c0_i32_0 : i32
    scf.if %2 {
      %c0_8 = arith.constant 0 : index
      %c0_9 = arith.constant 0 : index
      %10 = vector.load %arg2[%c0_8, %c0_9] : memref<16x1xi32, #tpu.memory_space<vmem>>, vector<16x1xi32>
      %11 = tpu.iota {dimensions = array<i32: 1>} : vector<16x64xi32>
      %12 = vector.broadcast %10 : vector<16x1xi32> to vector<16x64xi32>
      %13 = arith.cmpi eq, %11, %12 : vector<16x64xi32>
      %14 = arith.extui %13 : vector<16x64xi1> to vector<16x64xi32>
      %15 = arith.sitofp %14 : vector<16x64xi32> to vector<16x64xf32>
      %16 = arith.truncf %15 : vector<16x64xf32> to vector<16x64xbf16>
      %c0_10 = arith.constant 0 : index
      %c0_11 = arith.constant 0 : index
      %17 = vector.load %arg3[%c0_10, %c0_11] : memref<64x32xbf16, #tpu.memory_space<vmem>>, vector<64x32xbf16>
      %cst_12 = arith.constant dense<0.000000e+00> : vector<16x32xf32>
      %18 = tpu.matmul %16, %17, %cst_12 {dimension_numbers = #tpu.dot_dimension_numbers<[1], [0], [0], [1], [0, 0, 1, 1], [], []>} : vector<16x64xbf16>, vector<64x32xbf16>, vector<16x32xf32> -> vector<16x32xf32>
      %19 = arith.truncf %18 : vector<16x32xf32> to vector<16x32xbf16>
      %c0_13 = arith.constant 0 : index
      %c0_14 = arith.constant 0 : index
      %20 = vector.load %arg7[%c0_13, %c0_14] : memref<16x32xbf16, #tpu.memory_space<vmem>>, vector<16x32xbf16>
      tpu.vector_store %arg7[%c0_13, %c0_14], %19 {strides = array<i32>} : memref<16x32xbf16, #tpu.memory_space<vmem>>, vector<16x32xbf16>,
    } else {
    }
    %c0 = arith.constant 0 : index
    %c0_1 = arith.constant 0 : index
    %3 = vector.load %arg7[%c0, %c0_1] : memref<16x32xbf16, #tpu.memory_space<vmem>>, vector<16x32xbf16>
    %c0_2 = arith.constant 0 : index
    %c0_3 = arith.constant 0 : index
    %4 = vector.load %arg4[%c0_2, %c0_3] : memref<32x128xbf16, #tpu.memory_space<vmem>>, vector<32x128xbf16>
    %cst = arith.constant dense<0.000000e+00> : vector<16x128xf32>
    %5 = tpu.matmul %3, %4, %cst {dimension_numbers = #tpu.dot_dimension_numbers<[1], [0], [0], [1], [0, 0, 1, 1], [], []>} : vector<16x32xbf16>, vector<32x128xbf16>, vector<16x128xf32> -> vector<16x128xf32>
    %c0_4 = arith.constant 0 : index
    %c0_5 = arith.constant 0 : index
    %6 = vector.load %arg5[%c0_4, %c0_5] : memref<1x128xf32, #tpu.memory_space<vmem>>, vector<1x128xf32>
    %7 = vector.broadcast %6 : vector<1x128xf32> to vector<16x128xf32>
    %8 = arith.addf %5, %7 : vector<16x128xf32>
    %c0_6 = arith.constant 0 : index
    %c0_7 = arith.constant 0 : index
    %9 = vector.load %arg6[%c0_6, %c0_7] : memref<16x128xf32, #tpu.memory_space<vmem>>, vector<16x128xf32>
    tpu.vector_store %arg6[%c0_6, %c0_7], %8 {strides = array<i32>} : memref<16x128xf32, #tpu.memory_space<vmem>>, vector<16x128xf32>,
    return
  }
  func.func @transform_0(%arg0: i32, %arg1: i32) -> (i32, i32) {
    %c0_i32 = arith.constant 0 : i32
    %c0_i32_0 = arith.constant 0 : i32
    return %arg0, %c0_i32 : i32, i32
  }
  func.func @transform_1(%arg0: i32, %arg1: i32) -> (i32, i32) {
    %c0_i32 = arith.constant 0 : i32
    %c0_i32_0 = arith.constant 0 : i32
    %c0_i32_1 = arith.constant 0 : i32
    return %c0_i32, %c0_i32_0 : i32, i32
  }
  func.func @transform_2(%arg0: i32, %arg1: i32) -> (i32, i32) {
    %c0_i32 = arith.constant 0 : i32
    %c0_i32_0 = arith.constant 0 : i32
    return %c0_i32, %arg1 : i32, i32
  }
  func.func @transform_3(%arg0: i32, %arg1: i32) -> (i32, i32) {
    %c0_i32 = arith.constant 0 : i32
    %c0_i32_0 = arith.constant 0 : i32
    return %c0_i32, %arg1 : i32, i32
  }
  func.func @transform_4(%arg0: i32, %arg1: i32) -> (i32, i32) {
    %c0_i32 = arith.constant 0 : i32
    return %arg0, %arg1 : i32, i32
  }
}

</mosaic_0001>

<llo_original>
// kernel: tpu_custom_call.1
$region0: #{tpu_custom_call.1}
  #allocation0 [shape = 'u32[]', space=smem, size = 0x4, offset = 0x4, fixed_abs, tag = 'smem constant byte address 0x4 - core index']
  #allocation1 [shape = 'u32[144,128]{1,0:T(1,128)}', space=vmem, size = 0x12000, scoped, tag = 'internal scratch']
  #allocation2 [shape = 'bf16[16,32]{1,0:T(16,128)(2,1)}', space=vmem, size = 0x1000, scoped, tag = 'scratch operand']
  %s0 = inlined_call_operand.vmem [shape: s32[16,1], index: 0, kind: input, shape index: {}]
  %s1 = inlined_call_operand.vmem [shape: bf16[64,32], index: 1, kind: input, shape index: {}]
  %s2 = inlined_call_operand.vmem [shape: bf16[32,128], index: 2, kind: input, shape index: {}]
  %s3 = inlined_call_operand.vmem [shape: f32[1,128], index: 3, kind: input, shape index: {}]
  %s4 = inlined_call_operand.hbm [shape: f32[16,128], index: 4, kind: output, shape index: {}]
  %s5 = sld [smem:[#allocation0]]
  $region30: #{tpu_custom_call.1} parent=0
    _
  %s7 = ssub.s32 1, %s5
  %s8 = scalar_select 0, %s7, %s5
  $region1: #{tpu_custom_call.1} parent=0
    #allocation3 [shape = 'u8[8192]{0}', space=vmem, size = 0x2000, scoped, tag = 'output window, operand 0, single buffered']
    #allocation4 [shape = 's32[1]{0}', space=sflag, size = 0x4, scoped, tag = 'scoped memory for tpu_custom_call.1']
    %9 = vsyncpa [#allocation4], 0
    // Predicated region
    $region2: #{tpu_custom_call.1} parent=1 // pred_check
      _
    $region3: #{tpu_custom_call.1} parent=1 // pred_check_branch
      %11 = sbr.rel (0) target = $region5
    $region4: #{tpu_custom_call.1} parent=1 // pred_region
      _
    $region5: #{tpu_custom_call.1} parent=1 // pred_fallthru
      _
    // Predicated region
    $region6: #{tpu_custom_call.1} parent=1 // pred_check
      _
    $region7: #{tpu_custom_call.1} parent=1 // pred_check_branch
      %13 = sbr.rel (0) target = $region9
    $region8: #{tpu_custom_call.1} parent=1 // pred_region
      _
    $region9: #{tpu_custom_call.1} parent=1 // pred_fallthru
      _
    // Predicated region
    $region10: #{tpu_custom_call.1} parent=1 // pred_check
      _
    $region11: #{tpu_custom_call.1} parent=1 // pred_check_branch
      %15 = sbr.rel (0) target = $region13
    $region12: #{tpu_custom_call.1} parent=1 // pred_region
      _
    $region13: #{tpu_custom_call.1} parent=1 // pred_fallthru
      _
    // Predicated region
    $region14: #{tpu_custom_call.1} parent=1 // pred_check
      _
    $region15: #{tpu_custom_call.1} parent=1 // pred_check_branch
      %17 = sbr.rel (0) target = $region17
    $region16: #{tpu_custom_call.1} parent=1 // pred_region
      _
    $region17: #{tpu_custom_call.1} parent=1 // pred_fallthru
      _
    %p19 = scmp.eq.s32.totalorder 0, 0
    // Predicated region
    $region18: #{tpu_custom_call.1} parent=1 // pred_check
      %p20 = pneg %p19
    $region19: #{tpu_custom_call.1} parent=1 // pred_check_branch
      %22 = sbr.rel (%p20) target = $region21
    $region20: #{tpu_custom_call.1} parent=1 // pred_region
      %v23 = vld [vmem:[%s0] sm:$0xff]
      %v24 = vld [vmem:[%s0 + $0x8] sm:$0xff]
      %v25 = vlaneseq
      %v26 = vand.u32 %v25, 127
      %27 = vset.pattern.permute.xlu0 0
      %28 = vperm.xlu0 %27, %v23
      %v29 = vpop.permute.xlu0 %28
      %30 = vset.pattern.permute.xlu0 0
      %31 = vperm.xlu0 %30, %v24
      %v32 = vpop.permute.xlu0 %31
      %vm33 = vcmp.eq.s32.totalorder %v26, %v29
      %vm34 = vcmp.eq.s32.totalorder %v26, %v32
      %v35 = vsel %vm33, 1, 0
      %v36 = vsel %vm34, 1, 0
      %v37 = vcvt.s32.f32 %v35
      %v38 = vcvt.s32.f32 %v36
      %v39 = vpack.c.bf16 %v38, %v37
      %v40 = vld [vmem:[%s1] sm:$0xf]
      %v41 = vld [vmem:[%s1 + $0x4] sm:$0xf]
      %v42 = vld [vmem:[%s1 + $0x8] sm:$0xf]
      %v43 = vld [vmem:[%s1 + $0xc] sm:$0xf]
      %v44 = vld [vmem:[%s1 + $0x10] sm:$0xf]
      %v45 = vld [vmem:[%s1 + $0x14] sm:$0xf]
      %v46 = vld [vmem:[%s1 + $0x18] sm:$0xf]
      %v47 = vld [vmem:[%s1 + $0x1c] sm:$0xf]
      %v56 = vunpack.c.l.b16 %v40
      %v57 = vunpack.c.l.b16 %v41
      %v58 = vunpack.c.l.b16 %v42
      %v59 = vunpack.c.l.b16 %v43
      %v60 = vunpack.c.l.b16 %v44
      %v61 = vunpack.c.l.b16 %v45
      %v62 = vunpack.c.l.b16 %v46
      %v63 = vunpack.c.l.b16 %v47
      %v64 = vpack.c.b16 %v57, %v56
      %v65 = vpack.c.b16 %v59, %v58
      %v66 = vpack.c.b16 %v61, %v60
      %v67 = vpack.c.b16 %v63, %v62
      %vm72 = vcmask 523264
      %v74 = vsel %vm72, %v39, 0
      %76 = vmatprep.subr.bf16.mxu0 0
      %77 = vmatpush1.bf16.msra.mxu0 %v64
      %78 = vmatprep.subr.bf16.mxu0 0
      %79 = vmatpush1.bf16.msra.mxu0 %v65
      %80 = vmatprep.subr.bf16.mxu0 0
      %81 = vmatpush1.bf16.msra.mxu0 %v66
      %82 = vmatprep.subr.bf16.mxu0 0
      %83 = vmatpush1.bf16.msra.mxu0 %v67
      %84 = vmatprep.subr.bf16.mxu0 0
      %85 = vmatpush1.bf16.msra.mxu0 0
      %86 = vmatprep.subr.bf16.mxu0 0
      %87 = vmatpush1.bf16.msra.mxu0 0
      %88 = vmatprep.subr.bf16.mxu0 0
      %89 = vmatpush1.bf16.msra.mxu0 0
      %90 = vmatprep.subr.bf16.mxu0 0
      %91 = vmatpush1.bf16.msra.mxu0 0
      %92 = vmatprep.subr.bf16.mxu0 0
      %93 = vmatpush1.bf16.msra.mxu0 0
      %94 = vmatprep.subr.bf16.mxu0 0
      %95 = vmatpush1.bf16.msra.mxu0 0
      %96 = vmatprep.subr.bf16.mxu0 0
      %97 = vmatpush1.bf16.msra.mxu0 0
      %98 = vmatprep.subr.bf16.mxu0 0
      %99 = vmatpush1.bf16.msra.mxu0 0
      %100 = vmatprep.subr.bf16.mxu0 0
      %101 = vmatpush1.bf16.msra.mxu0 0
      %102 = vmatprep.subr.bf16.mxu0 0
      %103 = vmatpush1.bf16.msra.mxu0 0
      %104 = vmatprep.subr.bf16.mxu0 0
      %105 = vmatpush1.bf16.msra.mxu0 0
      %106 = vmatprep.subr.bf16.mxu0 0
      %107 = vmatpush1.bf16.msra.mxu0 0
      %108 = vmatprep.mubr.bf16.mxu0 0
      %109 = vmatmul.mubr.bf16.gmra.mrb[0].mxu0 %v74
      %v110 = vpop.f32.mrb[0].mxu0
      %v111 = vadd.f32 0.0, %v110
      %v112 = vpop.f32.mrb[0].mxu0
      %v113 = vpop.f32.mrb[0].mxu0
      %v114 = vadd.f32 0.0, %v113
      %v115 = vpop.f32.mrb[0].mxu0
      %116 = vdwg.mxu0
      %v117 = vpack.c.bf16 %v114, %v111
      %vm118 = vcmask 261120
      %119 = vst.msk [vmem:[#allocation2] sm:$0xff] %vm118, %v117
    $region21: #{tpu_custom_call.1} parent=1 // pred_fallthru
      _
    %v120 = vld [vmem:[#allocation2] sm:$0xff]
    %v121 = vld [vmem:[%s2] sm:$0xf]
    %v122 = vld [vmem:[%s2 + $0x4] sm:$0xf]
    %v123 = vld [vmem:[%s2 + $0x8] sm:$0xf]
    %v124 = vld [vmem:[%s2 + $0xc] sm:$0xf]
    %v125 = vld [vmem:[%s3] sm:$0x1]
    %v127 = vlaneseq
    %v128 = vshrl.u32 %v127, 7
    %v129 = vsub.s32 0, %v128
    %v130 = vrot.slane %v125, %v129
    %v136 = vunpack.c.l.b16 %v121
    %v137 = vunpack.c.l.b16 %v122
    %v138 = vunpack.c.l.b16 %v123
    %v139 = vunpack.c.l.b16 %v124
    %v140 = vpack.c.b16 %v137, %v136
    %v141 = vpack.c.b16 %v139, %v138
    %vm144 = vcmask 261120
    %v146 = vsel %vm144, %v120, 0
    %148 = vmatprep.subr.bf16.mxu0 0
    %149 = vmatpush1.bf16.msra.mxu0 %v140
    %150 = vmatprep.subr.bf16.mxu0 0
    %151 = vmatpush1.bf16.msra.mxu0 %v141
    %152 = vmatprep.subr.bf16.mxu0 0
    %153 = vmatpush1.bf16.msra.mxu0 0
    %154 = vmatprep.subr.bf16.mxu0 0
    %155 = vmatpush1.bf16.msra.mxu0 0
    %156 = vmatprep.subr.bf16.mxu0 0
    %157 = vmatpush1.bf16.msra.mxu0 0
    %158 = vmatprep.subr.bf16.mxu0 0
    %159 = vmatpush1.bf16.msra.mxu0 0
    %160 = vmatprep.subr.bf16.mxu0 0
    %161 = vmatpush1.bf16.msra.mxu0 0
    %162 = vmatprep.subr.bf16.mxu0 0
    %163 = vmatpush1.bf16.msra.mxu0 0
    %164 = vmatprep.subr.bf16.mxu0 0
    %165 = vmatpush1.bf16.msra.mxu0 0
    %166 = vmatprep.subr.bf16.mxu0 0
    %167 = vmatpush1.bf16.msra.mxu0 0
    %168 = vmatprep.subr.bf16.mxu0 0
    %169 = vmatpush1.bf16.msra.mxu0 0
    %170 = vmatprep.subr.bf16.mxu0 0
    %171 = vmatpush1.bf16.msra.mxu0 0
    %172 = vmatprep.subr.bf16.mxu0 0
    %173 = vmatpush1.bf16.msra.mxu0 0
    %174 = vmatprep.subr.bf16.mxu0 0
    %175 = vmatpush1.bf16.msra.mxu0 0
    %176 = vmatprep.subr.bf16.mxu0 0
    %177 = vmatpush1.bf16.msra.mxu0 0
    %178 = vmatprep.subr.bf16.mxu0 0
    %179 = vmatpush1.bf16.msra.mxu0 0
    %180 = vmatprep.mubr.bf16.mxu0 0
    %181 = vmatmul.mubr.bf16.gmra.mrb[0].mxu0 %v146
    %v182 = vpop.f32.mrb[0].mxu0
    %v183 = vadd.f32 %v130, %v182
    %v184 = vpop.f32.mrb[0].mxu0
    %v185 = vpop.f32.mrb[0].mxu0
    %v186 = vadd.f32 %v130, %v185
    %v187 = vpop.f32.mrb[0].mxu0
    %188 = vdwg.mxu0
    %189 = vst [vmem:[#allocation3] sm:$0xff] %v183
    %190 = vst [vmem:[#allocation3 + $0x8] sm:$0xff] %v186
    // Predicated region
    $region22: #{tpu_custom_call.1} parent=1 // pred_check
      _
    $region23: #{tpu_custom_call.1} parent=1 // pred_check_branch
      %192 = sbr.rel (0) target = $region25
    $region24: #{tpu_custom_call.1} parent=1 // pred_region
      %s194 = ssub.s32 256, 256
      %195 = vsyncadd [#allocation4], %s194
      %s196 = sshll.u32 [#allocation3], 4
      %s197 = int_to_ptr.vmem [resolvable:$true] %s196
      %202 = dma.vmem_to_hbm [thread:$0]  %s197, 256, %s4, [#allocation4], 128, 128, 8
    $region25: #{tpu_custom_call.1} parent=1 // pred_fallthru
      _
    // Predicated region
    $region26: #{tpu_custom_call.1} parent=1 // pred_check
      _
    $region27: #{tpu_custom_call.1} parent=1 // pred_check_branch
      %204 = sbr.rel (0) target = $region29
    $region28: #{tpu_custom_call.1} parent=1 // pred_region
      %205 = dma.done [#allocation4], 256
    $region29: #{tpu_custom_call.1} parent=1 // pred_fallthru
      _
    %206 = vsyncpa [#allocation4], 1

</llo_original>
